<compile_context>
chip_gen: v5e
topology: v5e:2x2
jax: 0.10.0
libtpu: 0.0.40
codegen_flags: <defaults>
</compile_context>

<pallas_src>
import jax
import jax.numpy as jnp
from jax.experimental import pallas as pl
from jax.experimental.pallas import tpu as pltpu

_PAD = 128  # single 128-lane state segment


def _round_up(n, m):
    return ((n + m - 1) // m) * m


def _layout(Ix, Iy, H, O):
    # Compact state layout (one 128-lane vector per row):
    #   [ x (Xw lanes) | y (Yw lanes) | hidden (H lanes) | zero padding ]
    # Segment widths accommodate both the initial sizes (Ix, Iy) and the recurrent sizes (O, O).
    Xw = max(Ix, O)
    Yw = max(Iy, O)
    off_x, off_y, off_h = 0, Xw, Xw + Yw
    assert off_h + H <= _PAD, "x|y|hidden must fit into a single 128-lane state"
    return off_x, off_y, off_h


# ----------------------------------------------------------------------------
# Kernel: applies the cell `steps` times on one batch tile.
#   state (TB, 128):  [ x | y | hidden | 0-pad ]
#   layer-1 out:      [ h1 (H) | o1 (H) | 0-pad ]
#   layer-2 out:      columns land directly at the state lane positions of x_new / y / hidden_new
# ----------------------------------------------------------------------------
def _make_kernel(fn, steps, Ix, Iy, H, O, compute_dtype, unroll):
    off_x, off_y, off_h = _layout(Ix, Iy, H, O)

    def kernel(comb0_ref, w1_ref, bias_ref, w2_ref, out_ref):
        # Resident operands: loaded once per batch tile, not per timestep.
        w1 = w1_ref[...]                 # (128, 128) compute_dtype
        w2 = w2_ref[...]                 # (128, 128) compute_dtype
        b1 = bias_ref[0:1, :]            # (1, 128) f32
        b2 = bias_ref[1:2, :]            # (1, 128) f32
        # fn is applied ONLY on the y lanes, so padding lanes stay exactly 0 even if fn(0) != 0.
        lane = jax.lax.broadcasted_iota(jnp.int32, (1, _PAD), 1)
        y_mask = (lane >= off_y) & (lane < off_y + O)

        def step(_, c):                  # c: (TB, 128) f32, lives in vregs across the unroll
            # Layer 1 (i2h & i2o first Linears fused): (TB,128) @ (128,128) -> (TB,128)
            a = jnp.tanh(
                jnp.dot(c.astype(compute_dtype), w1,
                        preferred_element_type=jnp.float32) + b1)
            # Layer 2 (second Linears fused; w2o columns duplicated into the y lanes):
            o = jnp.dot(a.astype(compute_dtype), w2,
                        preferred_element_type=jnp.float32) + b2
            # y = fn(x_new) on its lanes; x_new, hidden_new and padding pass through untouched.
            return jnp.where(y_mask, fn(o), o)

        c_final = jax.lax.fori_loop(0, steps, step, comb0_ref[...], unroll=unroll)
        out_ref[...] = c_final           # single lane-dense (TB, 128) store

    return kernel


# ----------------------------------------------------------------------------
# Parameter packing (done once, outside the per-step path).
# Original params use (in_features, out_features) layout (transpose of nn.Linear.weight),
# with combined input order [x | y | hidden].
# ----------------------------------------------------------------------------
def _pack_params(params, Ix, Iy, H, O, compute_dtype):
    (w1h, b1h, w2h, b2h, w1o, b1o, w2o, b2o) = params
    off_x, off_y, off_h = _layout(Ix, Iy, H, O)

    # Layer 1: rows follow the compact state layout; columns = [ h1 (H) | o1 (H) ].
    w1p = jnp.zeros((_PAD, _PAD), jnp.float32)
    for w, c0 in ((w1h, 0), (w1o, H)):
        w1p = w1p.at[off_x:off_x + Ix, c0:c0 + H].set(w[0:Ix])
        w1p = w1p.at[off_y:off_y + Iy, c0:c0 + H].set(w[Ix:Ix + Iy])
        w1p = w1p.at[off_h:off_h + H, c0:c0 + H].set(w[Ix + Iy:Ix + Iy + H])

    # Layer 2: rows = [ h1 | o1 ]; output columns land directly at state lane positions.
    w2p = jnp.zeros((_PAD, _PAD), jnp.float32)
    w2p = w2p.at[0:H, off_h:off_h + H].set(w2h)          # hidden_new
    w2p = w2p.at[H:2 * H, off_x:off_x + O].set(w2o)      # x_new
    w2p = w2p.at[H:2 * H, off_y:off_y + O].set(w2o)      # x_new duplicate -> y lanes (fn in-kernel)

    bias = jnp.zeros((2, _PAD), jnp.float32)
    bias = bias.at[0, 0:H].set(b1h)
    bias = bias.at[0, H:2 * H].set(b1o)
    bias = bias.at[1, off_h:off_h + H].set(b2h)
    bias = bias.at[1, off_x:off_x + O].set(b2o)
    bias = bias.at[1, off_y:off_y + O].set(b2o)

    return w1p.astype(compute_dtype), w2p.astype(compute_dtype), bias


# ----------------------------------------------------------------------------
# Wrapper: batched, multi-step forward.  steps=1 is exactly the module's forward.
# ----------------------------------------------------------------------------
def rnn_forward(params, fn, x, y, hidden, *, steps=1,
                compute_dtype=jnp.bfloat16, batch_tile=256):
    """Applies the RNN cell `steps` times inside a single pallas_call.

    x: (B, Ix), y: (B, Iy), hidden: (B, H).
    Each step:  combined = cat(x, y, hidden); hidden = i2h(combined);
                x = i2o(combined); y = fn(x)
    For steps > 1 the state feeds back (requires output_size == Ix == Iy).
    `fn` must be a JAX-traceable elementwise function (fused into the kernel).
    compute_dtype controls the MXU operand dtype; accumulation and state stay f32.
    """
    Ix, Iy, H = x.shape[-1], y.shape[-1], hidden.shape[-1]
    O = params[6].shape[1]
    assert 2 * H <= _PAD, "both layer-1 heads must fit into 128 lanes (hidden_size <= 64)"
    off_x, off_y, off_h = _layout(Ix, Iy, H, O)
    if steps > 1:
        assert O == Ix == Iy, "recurrence feedback requires output_size == len(x) == len(y)"

    B = x.shape[0]
    Bp8 = _round_up(B, 8)
    # Keep >= 2 parallel batch tiles whenever the batch allows it (v7x: 2 TensorCores/chip).
    half = _round_up(pl.cdiv(Bp8, 2), 8)
    TB = min(_round_up(batch_tile, 8), Bp8, half)
    TB = max(TB, 8)
    Bp = _round_up(B, TB)

    # Build the padded, compact state once (not per step).
    comb0 = jnp.zeros((Bp, _PAD), jnp.float32)
    comb0 = comb0.at[:B, off_x:off_x + Ix].set(x.astype(jnp.float32))
    comb0 = comb0.at[:B, off_y:off_y + Iy].set(y.astype(jnp.float32))
    comb0 = comb0.at[:B, off_h:off_h + H].set(hidden.astype(jnp.float32))

    w1p, w2p, biasp = _pack_params(params, Ix, Iy, H, O, compute_dtype)

    unroll = max(1, min(8, steps))
    grid = (Bp // TB,)
    out = pl.pallas_call(
        _make_kernel(fn, steps, Ix, Iy, H, O, compute_dtype, unroll),
        out_shape=jax.ShapeDtypeStruct((Bp, _PAD), jnp.float32),
        grid_spec=pltpu.PrefetchScalarGridSpec(
            num_scalar_prefetch=0,
            grid=grid,
            in_specs=[
                pl.BlockSpec((TB, _PAD), lambda i: (i, 0)),      # batched state tile
                pl.BlockSpec((_PAD, _PAD), lambda i: (0, 0)),    # W1 (resident)
                pl.BlockSpec((2, _PAD), lambda i: (0, 0)),       # biases (resident)
                pl.BlockSpec((_PAD, _PAD), lambda i: (0, 0)),    # W2 (resident)
            ],
            out_specs=pl.BlockSpec((TB, _PAD), lambda i: (i, 0)),
        ),
        compiler_params=pltpu.CompilerParams(dimension_semantics=("parallel",)),
    )(comb0, w1p, biasp, w2p)

    x_new = out[:B, off_x:off_x + O]
    y_new = out[:B, off_y:off_y + O]
    hid_new = out[:B, off_h:off_h + H]
    return x_new, y_new, hid_new


# ----------------------------------------------------------------------------
# Deterministic synthetic parameters (weights stored as (in_features, out_features)).
# ----------------------------------------------------------------------------
def init_params(key, input_size, hidden_size, output_size):
    D = input_size + hidden_size
    ks = jax.random.split(key, 8)
    s = 0.1
    w1h = s * jax.random.normal(ks[0], (D, hidden_size), jnp.float32)
    b1h = s * jax.random.normal(ks[1], (hidden_size,), jnp.float32)
    w2h = s * jax.random.normal(ks[2], (hidden_size, hidden_size), jnp.float32)
    b2h = s * jax.random.normal(ks[3], (hidden_size,), jnp.float32)
    w1o = s * jax.random.normal(ks[4], (D, hidden_size), jnp.float32)
    b1o = s * jax.random.normal(ks[5], (hidden_size,), jnp.float32)
    w2o = s * jax.random.normal(ks[6], (hidden_size, output_size), jnp.float32)
    b2o = s * jax.random.normal(ks[7], (output_size,), jnp.float32)
    return (w1h, b1h, w2h, b2h, w1o, b1o, w2o, b2o)


def _reference(params, fn, x, y, hidden, steps):
    """Pure-JAX reference: `steps` applications of the PyTorch module's forward (batched)."""
    (w1h, b1h, w2h, b2h, w1o, b1o, w2o, b2o) = params
    for _ in range(steps):
        c = jnp.concatenate([x, y, hidden], axis=-1)
        hidden = jnp.tanh(c @ w1h + b1h) @ w2h + b2h
        x_new = jnp.tanh(c @ w1o + b1o) @ w2o + b2o
        x, y = x_new, fn(x_new)
    return x, y, hidden


if __name__ == "__main__":
    # Small shapes consistent with the module; output_size == len(x) == len(y) so the
    # cell can be applied recurrently (x_new, fn(x_new), hidden_new feed back).
    Ix = Iy = 8                 # input_size = 16
    hidden_size = 32
    output_size = 8
    B = 256                     # batch of independent cells -> two 128-row parallel tiles
    T = 8                       # timesteps fused into one pallas_call

    key = jax.random.PRNGKey(0)
    kp, kx, ky, kh = jax.random.split(key, 4)
    params = init_params(kp, Ix + Iy, hidden_size, output_size)
    x0 = jax.random.normal(kx, (B, Ix), jnp.float32)
    y0 = jax.random.normal(ky, (B, Iy), jnp.float32)
    h0 = jax.random.normal(kh, (B, hidden_size), jnp.float32)

    fn = jnp.tanh  # example user-supplied `fn` (must be JAX-traceable to be fused in-kernel)
    # TODO(synk): arbitrary non-JAX Python `fn` callables cannot be fused into the kernel.

    # --- single-step check: exactly the module's forward semantics (f32 MXU path) ---
    x1, y1, h1 = rnn_forward(params, fn, x0, y0, h0, steps=1, compute_dtype=jnp.float32)
    jax.block_until_ready((x1, y1, h1))
    xr1, yr1, hr1 = _reference(params, fn, x0, y0, h0, 1)
    assert jnp.allclose(x1, xr1, atol=1e-4)
    assert jnp.allclose(y1, yr1, atol=1e-4)
    assert jnp.allclose(h1, hr1, atol=1e-4)

    # --- fused multi-step recurrence (f32), weights resident across all T steps ---
    xT, yT, hT = rnn_forward(params, fn, x0, y0, h0, steps=T, compute_dtype=jnp.float32)
    jax.block_until_ready((xT, yT, hT))
    xrT, yrT, hrT = _reference(params, fn, x0, y0, h0, T)
    assert jnp.allclose(xT, xrT, atol=1e-4)
    assert jnp.allclose(yT, yrT, atol=1e-4)
    assert jnp.allclose(hT, hrT, atol=1e-4)

    # --- default bf16 MXU-operand path (f32 accumulation, f32 state) ---
    xb, yb, hb = rnn_forward(params, fn, x0, y0, h0, steps=T)
    jax.block_until_ready((xb, yb, hb))
    assert bool(jnp.isfinite(xb).all() & jnp.isfinite(yb).all() & jnp.isfinite(hb).all())
    assert jnp.allclose(xb, xrT, atol=1e-1)
    assert jnp.allclose(hb, hrT, atol=1e-1)

    print("KERNEL_OK")
</pallas_src>

<mosaic_0001>
module attributes {stable_mosaic.version = 11 : i64} {
  func.func @kernel(%arg0: i32, %arg1: memref<128x128xf32, #tpu.memory_space<vmem>>, %arg2: memref<128x128xf32, #tpu.memory_space<vmem>>, %arg3: memref<2x128xf32, #tpu.memory_space<vmem>>, %arg4: memref<128x128xf32, #tpu.memory_space<vmem>>, %arg5: memref<128x128xf32, #tpu.memory_space<vmem>>) attributes {dimension_semantics = [#tpu.dimension_semantics<parallel>], iteration_bounds = array<i64: 2>, scalar_prefetch = 0 : i64, scratch_operands = 0 : i64, tpu.core_type = #tpu.core_type<tc>, window_params = [{transform_indices = @transform_0, window_bounds = array<i64: 128, 128>}, {pipeline_mode = #tpu.pipeline_mode<synchronous>, transform_indices = @transform_1, window_bounds = array<i64: 128, 128>}, {pipeline_mode = #tpu.pipeline_mode<synchronous>, transform_indices = @transform_2, window_bounds = array<i64: 2, 128>}, {pipeline_mode = #tpu.pipeline_mode<synchronous>, transform_indices = @transform_3, window_bounds = array<i64: 128, 128>}, {transform_indices = @transform_4, window_bounds = array<i64: 128, 128>}]} {
    %c0 = arith.constant 0 : index
    %c0_0 = arith.constant 0 : index
    %0 = vector.load %arg2[%c0, %c0_0] : memref<128x128xf32, #tpu.memory_space<vmem>>, vector<128x128xf32>
    %c0_1 = arith.constant 0 : index
    %c0_2 = arith.constant 0 : index
    %1 = vector.load %arg4[%c0_1, %c0_2] : memref<128x128xf32, #tpu.memory_space<vmem>>, vector<128x128xf32>
    %c0_3 = arith.constant 0 : index
    %c0_4 = arith.constant 0 : index
    %2 = vector.load %arg3[%c0_3, %c0_4] : memref<2x128xf32, #tpu.memory_space<vmem>>, vector<1x128xf32>
    %c1 = arith.constant 1 : index
    %c0_5 = arith.constant 0 : index
    %3 = vector.load %arg3[%c1, %c0_5] : memref<2x128xf32, #tpu.memory_space<vmem>>, vector<1x128xf32>
    %4 = tpu.iota {dimensions = array<i32: 1>} : vector<1x128xi32>
    %c8_i32 = arith.constant 8 : i32
    %5 = vector.broadcast %c8_i32 : i32 to vector<1x128xi32>
    %6 = arith.cmpi sge, %4, %5 : vector<1x128xi32>
    %c16_i32 = arith.constant 16 : i32
    %7 = vector.broadcast %c16_i32 : i32 to vector<1x128xi32>
    %8 = arith.cmpi slt, %4, %7 : vector<1x128xi32>
    %9 = arith.andi %6, %8 : vector<1x128xi1>
    %c0_6 = arith.constant 0 : index
    %c0_7 = arith.constant 0 : index
    %10 = vector.load %arg1[%c0_6, %c0_7] : memref<128x128xf32, #tpu.memory_space<vmem>>, vector<128x128xf32>
    %c0_i32 = arith.constant 0 : i32
    %cst = arith.constant dense<0.000000e+00> : vector<128x128xf32>
    %11 = tpu.matmul %10, %0, %cst {dimension_numbers = #tpu.dot_dimension_numbers<[1], [0], [0], [1], [0, 0, 1, 1], [], []>} : vector<128x128xf32>, vector<128x128xf32>, vector<128x128xf32> -> vector<128x128xf32>
    %12 = vector.broadcast %2 : vector<1x128xf32> to vector<128x128xf32>
    %13 = arith.addf %11, %12 : vector<128x128xf32>
    %14 = math.tanh %13 : vector<128x128xf32>
    %cst_8 = arith.constant dense<0.000000e+00> : vector<128x128xf32>
    %15 = tpu.matmul %14, %1, %cst_8 {dimension_numbers = #tpu.dot_dimension_numbers<[1], [0], [0], [1], [0, 0, 1, 1], [], []>} : vector<128x128xf32>, vector<128x128xf32>, vector<128x128xf32> -> vector<128x128xf32>
    %16 = vector.broadcast %3 : vector<1x128xf32> to vector<128x128xf32>
    %17 = arith.addf %15, %16 : vector<128x128xf32>
    %18 = math.tanh %17 : vector<128x128xf32>
    %19 = vector.shape_cast %9 : vector<1x128xi1> to vector<1x128xi1>
    %20 = vector.broadcast %19 : vector<1x128xi1> to vector<128x128xi1>
    %21 = arith.select %20, %18, %17 : vector<128x128xi1>, vector<128x128xf32>
    %c0_9 = arith.constant 0 : index
    %c0_10 = arith.constant 0 : index
    %22 = vector.load %arg5[%c0_9, %c0_10] : memref<128x128xf32, #tpu.memory_space<vmem>>, vector<128x128xf32>
    tpu.vector_store %arg5[%c0_9, %c0_10], %21 {strides = array<i32>} : memref<128x128xf32, #tpu.memory_space<vmem>>, vector<128x128xf32>,
    return
  }
  func.func @transform_0(%arg0: i32) -> (i32, i32) {
    %c0_i32 = arith.constant 0 : i32
    %c0_i32_0 = arith.constant 0 : i32
    return %arg0, %c0_i32 : i32, i32
  }
  func.func @transform_1(%arg0: i32) -> (i32, i32) {
    %c0_i32 = arith.constant 0 : i32
    %c0_i32_0 = arith.constant 0 : i32
    %c0_i32_1 = arith.constant 0 : i32
    return %c0_i32, %c0_i32_0 : i32, i32
  }
  func.func @transform_2(%arg0: i32) -> (i32, i32) {
    %c0_i32 = arith.constant 0 : i32
    %c0_i32_0 = arith.constant 0 : i32
    %c0_i32_1 = arith.constant 0 : i32
    return %c0_i32, %c0_i32_0 : i32, i32
  }
  func.func @transform_3(%arg0: i32) -> (i32, i32) {
    %c0_i32 = arith.constant 0 : i32
    %c0_i32_0 = arith.constant 0 : i32
    %c0_i32_1 = arith.constant 0 : i32
    return %c0_i32, %c0_i32_0 : i32, i32
  }
  func.func @transform_4(%arg0: i32) -> (i32, i32) {
    %c0_i32 = arith.constant 0 : i32
    %c0_i32_0 = arith.constant 0 : i32
    return %arg0, %c0_i32 : i32, i32
  }
}

</mosaic_0001>

<llo_original>
// kernel: tpu_custom_call.1
$region0: #{tpu_custom_call.1}
  #allocation0 [shape = 'u32[]', space=smem, size = 0x4, offset = 0x4, fixed_abs, tag = 'smem constant byte address 0x4 - core index']
  #allocation1 [shape = 'u32[72,128]{1,0:T(1,128)}', space=vmem, size = 0x9000, scoped, tag = 'internal scratch']
  %s0 = inlined_call_operand.hbm [shape: f32[256,128], index: 0, kind: input, shape index: {}]
  %s1 = inlined_call_operand.hbm [shape: f32[128,128], index: 1, kind: input, shape index: {}]
  %s2 = inlined_call_operand.hbm [shape: f32[2,128], index: 2, kind: input, shape index: {}]
  %s3 = inlined_call_operand.hbm [shape: f32[128,128], index: 3, kind: input, shape index: {}]
  %s4 = inlined_call_operand.hbm [shape: f32[256,128], index: 4, kind: output, shape index: {}]
  %s5 = sld [smem:[#allocation0]]
  $region65: #{tpu_custom_call.1} parent=0
    _
  %s7 = ssub.s32 1, %s5
  %s8 = scalar_select 0, %s7, %s5
  $region1: #{tpu_custom_call.1} parent=0
    #allocation2 [shape = 'u8[131072]{0}', space=vmem, size = 0x20000, scoped, tag = 'input window, operand 0']
    #allocation3 [shape = 's32[2]{0}', space=sflag, size = 0x8, scoped, tag = 'scoped memory for tpu_custom_call.1']
    #allocation4 [shape = 's32[2]{0}', space=sflag, size = 0x8, scoped, tag = 'scoped memory for tpu_custom_call.1']
    #allocation5 [shape = 'u8[65536]{0}', space=vmem, size = 0x10000, scoped, tag = 'input window, operand 1, single buffered']
    #allocation6 [shape = 's32[1]{0}', space=sflag, size = 0x4, scoped, tag = 'scoped memory for tpu_custom_call.1']
    #allocation7 [shape = 'u8[1024]{0}', space=vmem, size = 0x400, scoped, tag = 'input window, operand 2, single buffered']
    #allocation8 [shape = 'u8[65536]{0}', space=vmem, size = 0x10000, scoped, tag = 'input window, operand 3, single buffered']
    #allocation9 [shape = 's32[1]{0}', space=sflag, size = 0x4, scoped, tag = 'scoped memory for tpu_custom_call.1']
    #allocation10 [shape = 'u8[131072]{0}', space=vmem, size = 0x20000, scoped, tag = 'output window, operand 0']
    %9 = vsyncpa [#allocation3], 0
    %s10 = scalar_lea.sflag [#allocation3], 1
    %11 = vsyncpa %s10, 0
    %12 = vsyncpa [#allocation6], 0
    %13 = vsyncpa [#allocation9], 0
    %14 = vsyncpa [#allocation4], 0
    %s15 = scalar_lea.sflag [#allocation4], 1
    %16 = vsyncpa %s15, 0
    loop: start=0, step=1, limit=4
    $region2: #{tpu_custom_call.1} parent=1 // loop_pre_header
      _
    $region3: #{tpu_custom_call.1} parent=1 // loop_header
      %s18 = sphi 0, %s22
      %p19 = scmp.ge.s32.totalorder %s18, 4
      %s28 = sphi 0, %s30
      %s31 = sphi 0, %s28
      %s32 = sphi 0, %s31
      %s48 = sphi 0, %s32
      %s52 = sphi 0, %s52
      %s54 = sphi 0, %s52
      %s55 = sphi 0, %s54
      %s69 = sphi 0, %s55
      %s73 = sphi 0, %s73
      %s75 = sphi 0, %s73
      %s76 = sphi 0, %s75
      %s90 = sphi 0, %s76
      %s94 = sphi 0, %s94
      %s96 = sphi 0, %s94
      %s97 = sphi 0, %s96
      %s111 = sphi 0, %s97
      %s117 = sphi 0, %s119
      %s120 = sphi 0, %s117
      %s121 = sphi 0, %s120
      %s137 = sphi 0, %s121
    $region4: #{tpu_custom_call.1} parent=1 // loop_header_branch
      %21 = sbr.rel (%p19) target = $region8
    $region5: #{tpu_custom_call.1} parent=1 // loop_body
      %s23 = ssub.s32 %s18, 1
      %s24 = ssub.s32 %s18, 2
      %s25 = sadd.s32 %s18, 1
      %s26 = ssub.s32 %s18, %s25
      %p27 = scmp.eq.s32.totalorder %s26, 0
      %s29 = sadd.s32 %s28, 1
      %s30 = scalar_select %p27, %s28, %s29
      %p33 = pneg %p27
      %p34 = scmp.eq.s32.totalorder %s18, 1
      %p35 = por %p33, %p34
      %p36 = scmp.ne.s32.totalorder %s28, %s31
      %p37 = scmp.eq.s32.totalorder %s18, 0
      %p38 = por %p36, %p37
      %p39 = scmp.ne.s32.totalorder %s28, %s31
      %p40 = scmp.eq.s32.totalorder %s23, 1
      %p41 = por %p39, %p40
      %p42 = scmp.ne.s32.totalorder %s31, %s32
      %p43 = scmp.eq.s32.totalorder %s23, 0
      %p44 = por %p42, %p43
      %p45 = scmp.ne.s32.totalorder %s31, %s32
      %p46 = scmp.eq.s32.totalorder %s24, 1
      %p47 = por %p45, %p46
      %p49 = scmp.ne.s32.totalorder %s32, %s48
      %p50 = scmp.eq.s32.totalorder %s24, 0
      %p51 = por %p49, %p50
      %s53 = sadd.s32 %s52, 1
      %p56 = scmp.eq.s32.totalorder %s18, 1
      %p57 = scmp.ne.s32.totalorder %s52, %s54
      %p58 = scmp.eq.s32.totalorder %s18, 0
      %p59 = por %p57, %p58
      %p60 = scmp.ne.s32.totalorder %s52, %s54
      %p61 = scmp.eq.s32.totalorder %s23, 1
      %p62 = por %p60, %p61
      %p63 = scmp.ne.s32.totalorder %s54, %s55
      %p64 = scmp.eq.s32.totalorder %s23, 0
      %p65 = por %p63, %p64
      %p66 = scmp.ne.s32.totalorder %s54, %s55
      %p67 = scmp.eq.s32.totalorder %s24, 1
      %p68 = por %p66, %p67
      %p70 = scmp.ne.s32.totalorder %s55, %s69
      %p71 = scmp.eq.s32.totalorder %s24, 0
      %p72 = por %p70, %p71
      %s74 = sadd.s32 %s73, 1
      %p77 = scmp.eq.s32.totalorder %s18, 1
      %p78 = scmp.ne.s32.totalorder %s73, %s75
      %p79 = scmp.eq.s32.totalorder %s18, 0
      %p80 = por %p78, %p79
      %p81 = scmp.ne.s32.totalorder %s73, %s75
      %p82 = scmp.eq.s32.totalorder %s23, 1
      %p83 = por %p81, %p82
      %p84 = scmp.ne.s32.totalorder %s75, %s76
      %p85 = scmp.eq.s32.totalorder %s23, 0
      %p86 = por %p84, %p85
      %p87 = scmp.ne.s32.totalorder %s75, %s76
      %p88 = scmp.eq.s32.totalorder %s24, 1
      %p89 = por %p87, %p88
      %p91 = scmp.ne.s32.totalorder %s76, %s90
      %p92 = scmp.eq.s32.totalorder %s24, 0
      %p93 = por %p91, %p92
      %s95 = sadd.s32 %s94, 1
      %p98 = scmp.eq.s32.totalorder %s18, 1
      %p99 = scmp.ne.s32.totalorder %s94, %s96
      %p100 = scmp.eq.s32.totalorder %s18, 0
      %p101 = por %p99, %p100
      %p102 = scmp.ne.s32.totalorder %s94, %s96
      %p103 = scmp.eq.s32.totalorder %s23, 1
      %p104 = por %p102, %p103
      %p105 = scmp.ne.s32.totalorder %s96, %s97
      %p106 = scmp.eq.s32.totalorder %s23, 0
      %p107 = por %p105, %p106
      %p108 = scmp.ne.s32.totalorder %s96, %s97
      %p109 = scmp.eq.s32.totalorder %s24, 1
      %p110 = por %p108, %p109
      %p112 = scmp.ne.s32.totalorder %s97, %s111
      %p113 = scmp.eq.s32.totalorder %s24, 0
      %p114 = por %p112, %p113
      %s115 = ssub.s32 %s18, %s25
      %p116 = scmp.eq.s32.totalorder %s115, 0
      %s118 = sadd.s32 %s117, 1
      %s119 = scalar_select %p116, %s117, %s118
      %p122 = pneg %p116
      %p123 = scmp.eq.s32.totalorder %s18, 1
      %p124 = por %p122, %p123
      %p125 = scmp.ne.s32.totalorder %s117, %s120
      %p126 = scmp.eq.s32.totalorder %s18, 0
      %p127 = por %p125, %p126
      %p128 = scmp.ne.s32.totalorder %s117, %s120
      %p129 = scmp.eq.s32.totalorder %s23, 1
      %p130 = por %p128, %p129
      %p131 = scmp.ne.s32.totalorder %s120, %s121
      %p132 = scmp.eq.s32.totalorder %s23, 0
      %p133 = por %p131, %p132
      %p134 = scmp.ne.s32.totalorder %s120, %s121
      %p135 = scmp.eq.s32.totalorder %s24, 1
      %p136 = por %p134, %p135
      %p138 = scmp.ne.s32.totalorder %s121, %s137
      %p139 = scmp.eq.s32.totalorder %s24, 0
      %p140 = por %p138, %p139
      %p141 = scmp.le.s32.totalorder 1, %s18
      %p142 = scmp.lt.s32.totalorder %s18, 3
      %p143 = pnand %p141, %p142
      %p144 = pneg %p143
      // Predicated region
      $region9: #{tpu_custom_call.1} parent=5 // pred_check
        _
      $region10: #{tpu_custom_call.1} parent=5 // pred_check_branch
        %146 = sbr.rel (%p143) target = $region12
      $region11: #{tpu_custom_call.1} parent=5 // pred_region
        %s147 = ssub.s32 %s18, 1
        // Predicated region
        $region13: #{tpu_custom_call.1} parent=11 // pred_check
          %p148 = pneg %p65
        $region14: #{tpu_custom_call.1} parent=11 // pred_check_branch
          %150 = sbr.rel (%p148) target = $region16
        $region15: #{tpu_custom_call.1} parent=11 // pred_region
          %152 = vsyncadd [#allocation6], 0
          %s153 = sshll.u32 %s1, 4
          %s154 = int_to_ptr.hbm [resolvable:$true] %s153
          %s155 = sshll.u32 [#allocation5], 4
          %s156 = int_to_ptr.vmem [resolvable:$true] %s155
          %161 = dma.hbm_to_vmem [thread:$0]  %s154, 2048, %s156, [#allocation6], 128, 128, 8
        $region16: #{tpu_custom_call.1} parent=11 // pred_fallthru
          _
        // Predicated region
        $region17: #{tpu_custom_call.1} parent=11 // pred_check
          %p162 = pneg %p86
        $region18: #{tpu_custom_call.1} parent=11 // pred_check_branch
          %164 = sbr.rel (%p162) target = $region20
        $region19: #{tpu_custom_call.1} parent=11 // pred_region
          %166 = vsyncadd [#allocation6], 0
          %s168 = sshll.u32 %s2, 4
          %s169 = int_to_ptr.hbm [resolvable:$true] %s168
          %s170 = sshll.u32 [#allocation7], 4
          %s171 = int_to_ptr.vmem [resolvable:$true] %s170
          %173 = dma.hbm_to_vmem [thread:$0]  %s169, 32, %s171, [#allocation6]
        $region20: #{tpu_custom_call.1} parent=11 // pred_fallthru
          _
        // Predicated region
        $region21: #{tpu_custom_call.1} parent=11 // pred_check
          %p174 = pneg %p107
        $region22: #{tpu_custom_call.1} parent=11 // pred_check_branch
          %176 = sbr.rel (%p174) target = $region24
        $region23: #{tpu_custom_call.1} parent=11 // pred_region
          %178 = vsyncadd [#allocation9], 0
          %s179 = sshll.u32 %s3, 4
          %s180 = int_to_ptr.hbm [resolvable:$true] %s179
          %s181 = sshll.u32 [#allocation8], 4
          %s182 = int_to_ptr.vmem [resolvable:$true] %s181
          %187 = dma.hbm_to_vmem [thread:$0]  %s180, 2048, %s182, [#allocation9], 128, 128, 8
        $region24: #{tpu_custom_call.1} parent=11 // pred_fallthru
          _
      $region12: #{tpu_custom_call.1} parent=5 // pred_fallthru
        _
      %p188 = scmp.lt.s32.totalorder %s18, 2
      // Predicated region
      $region25: #{tpu_custom_call.1} parent=5 // pred_check
        %p189 = pneg %p188
      $region26: #{tpu_custom_call.1} parent=5 // pred_check_branch
        %191 = sbr.rel (%p189) target = $region28
      $region27: #{tpu_custom_call.1} parent=5 // pred_region
        // Predicated region
        $region29: #{tpu_custom_call.1} parent=27 // pred_check
          %p192 = pneg %p38
        $region30: #{tpu_custom_call.1} parent=27 // pred_check_branch
          %194 = sbr.rel (%p192) target = $region32
        $region31: #{tpu_custom_call.1} parent=27 // pred_region
          %s195 = sand.u32 %s28, 1
          %s196 = scalar_lea.sflag [#allocation3], %s195
          %s197 = sand.u32 %s28, 1
          %s198 = smul.addr %s197, 128
          %s199 = scalar_lea.vmem [#allocation2], %s198
          %s200 = smul.u32 16, %s18
          %202 = vsyncadd %s196, 0
          %s203 = smul.addr %s200, 8
          %s204 = scalar_lea.hbm %s0, %s203
          %s205 = sshll.u32 %s204, 4
          %s206 = int_to_ptr.hbm [resolvable:$true] %s205
          %s207 = sshll.u32 %s199, 4
          %s208 = int_to_ptr.vmem [resolvable:$true] %s207
          %213 = dma.hbm_to_vmem [thread:$0]  %s206, 2048, %s208, %s196, 128, 128, 8
        $region32: #{tpu_custom_call.1} parent=27 // pred_fallthru
          _
      $region28: #{tpu_custom_call.1} parent=5 // pred_fallthru
        _
      %p214 = scmp.le.s32.totalorder 1, %s18
      %p215 = scmp.lt.s32.totalorder %s18, 3
      %p216 = pnand %p214, %p215
      %p217 = pneg %p216
      // Predicated region
      $region33: #{tpu_custom_call.1} parent=5 // pred_check
        _
      $region34: #{tpu_custom_call.1} parent=5 // pred_check_branch
        %219 = sbr.rel (%p216) target = $region36
      $region35: #{tpu_custom_call.1} parent=5 // pred_region
        %s220 = ssub.s32 %s18, 1
        %s221 = sand.u32 %s31, 1
        %s222 = scalar_lea.sflag [#allocation3], %s221
        %s223 = sand.u32 %s31, 1
        %s224 = smul.addr %s223, 128
        %s225 = scalar_lea.vmem [#allocation2], %s224
        // Predicated region
        $region37: #{tpu_custom_call.1} parent=35 // pred_check
          %p226 = pneg %p44
        $region38: #{tpu_custom_call.1} parent=35 // pred_check_branch
          %228 = sbr.rel (%p226) target = $region40
        $region39: #{tpu_custom_call.1} parent=35 // pred_region
          %230 = dma.done %s222, 2048
        $region40: #{tpu_custom_call.1} parent=35 // pred_fallthru
          _
        // Predicated region
        $region41: #{tpu_custom_call.1} parent=35 // pred_check
          %p231 = pneg %p65
        $region42: #{tpu_custom_call.1} parent=35 // pred_check_branch
          %233 = sbr.rel (%p231) target = $region44
        $region43: #{tpu_custom_call.1} parent=35 // pred_region
          %235 = dma.done [#allocation6], 2048
        $region44: #{tpu_custom_call.1} parent=35 // pred_fallthru
          _
        // Predicated region
        $region45: #{tpu_custom_call.1} parent=35 // pred_check
          %p236 = pneg %p86
        $region46: #{tpu_custom_call.1} parent=35 // pred_check_branch
          %238 = sbr.rel (%p236) target = $region48
        $region47: #{tpu_custom_call.1} parent=35 // pred_region
          %240 = dma.done [#allocation6], 32
        $region48: #{tpu_custom_call.1} parent=35 // pred_fallthru
          _
        // Predicated region
        $region49: #{tpu_custom_call.1} parent=35 // pred_check
          %p241 = pneg %p107
        $region50: #{tpu_custom_call.1} parent=35 // pred_check_branch
          %243 = sbr.rel (%p241) target = $region52
        $region51: #{tpu_custom_call.1} parent=35 // pred_region
          %245 = dma.done [#allocation9], 2048
        $region52: #{tpu_custom_call.1} parent=35 // pred_fallthru
          _
        %s246 = sand.u32 %s31, 1
        %s247 = scalar_lea.sflag [#allocation3], %s246
        %s248 = sand.u32 %s31, 1
        %s249 = smul.addr %s248, 128
        %s250 = scalar_lea.vmem [#allocation2], %s249
        %p251 = pneg %p44
        %p252 = pneg %p41
        %p253 = pneg %p65
        %p254 = pneg %p62
        %p255 = pneg %p86
        %p256 = pneg %p83
        %p257 = pneg %p107
        %p258 = pneg %p104
        %p259 = pneg %p133
        %p260 = pneg %p130
        %s261 = sand.u32 %s120, 1
        %s262 = scalar_lea.sflag [#allocation4], %s261
        %s263 = sand.u32 %s120, 1
        %s264 = smul.addr %s263, 128
        %s265 = scalar_lea.vmem [#allocation10], %s264
        %s266 = smul.u32 16, %s23
        %s267 = smul.u32 16, %s23
        %v268 = vld [vmem:[#allocation5] sm:$0xff]
        %v269 = vld [vmem:[#allocation5 + $0x8] sm:$0xff]
        %v270 = vld [vmem:[#allocation5 + $0x10] sm:$0xff]
        %v271 = vld [vmem:[#allocation5 + $0x18] sm:$0xff]
        %v272 = vld [vmem:[#allocation5 + $0x20] sm:$0xff]
        %v273 = vld [vmem:[#allocation5 + $0x28] sm:$0xff]
        %v274 = vld [vmem:[#allocation5 + $0x30] sm:$0xff]
        %v275 = vld [vmem:[#allocation5 + $0x38] sm:$0xff]
        %v276 = vld [vmem:[#allocation5 + $0x40] sm:$0xff]
        %v277 = vld [vmem:[#allocation5 + $0x48] sm:$0xff]
        %v278 = vld [vmem:[#allocation5 + $0x50] sm:$0xff]
        %v279 = vld [vmem:[#allocation5 + $0x58] sm:$0xff]
        %v280 = vld [vmem:[#allocation5 + $0x60] sm:$0xff]
        %v281 = vld [vmem:[#allocation5 + $0x68] sm:$0xff]
        %v282 = vld [vmem:[#allocation5 + $0x70] sm:$0xff]
        %v283 = vld [vmem:[#allocation5 + $0x78] sm:$0xff]
        %v284 = vld [vmem:[#allocation8] sm:$0xff]
        %v285 = vld [vmem:[#allocation8 + $0x8] sm:$0xff]
        %v286 = vld [vmem:[#allocation8 + $0x10] sm:$0xff]
        %v287 = vld [vmem:[#allocation8 + $0x18] sm:$0xff]
        %v288 = vld [vmem:[#allocation8 + $0x20] sm:$0xff]
        %v289 = vld [vmem:[#allocation8 + $0x28] sm:$0xff]
        %v290 = vld [vmem:[#allocation8 + $0x30] sm:$0xff]
        %v291 = vld [vmem:[#allocation8 + $0x38] sm:$0xff]
        %v292 = vld [vmem:[#allocation8 + $0x40] sm:$0xff]
        %v293 = vld [vmem:[#allocation8 + $0x48] sm:$0xff]
        %v294 = vld [vmem:[#allocation8 + $0x50] sm:$0xff]
        %v295 = vld [vmem:[#allocation8 + $0x58] sm:$0xff]
        %v296 = vld [vmem:[#allocation8 + $0x60] sm:$0xff]
        %v297 = vld [vmem:[#allocation8 + $0x68] sm:$0xff]
        %v298 = vld [vmem:[#allocation8 + $0x70] sm:$0xff]
        %v299 = vld [vmem:[#allocation8 + $0x78] sm:$0xff]
        %v300 = vld [vmem:[#allocation7] sm:$0x1]
        %v301 = vld [vmem:[#allocation7 + $0x1] sm:$0x1]
        %v302 = vlaneseq
        %v303 = vand.u32 %v302, 127
        %vm304 = vcmp.ge.s32.totalorder %v303, 8
        %vm305 = vcmp.lt.s32.totalorder %v303, 16
        %vm306 = vmand %vm304, %vm305
        %v307 = vld [vmem:[%s225] sm:$0xff]
        %v308 = vld [vmem:[%s225 + $0x8] sm:$0xff]
        %v309 = vld [vmem:[%s225 + $0x10] sm:$0xff]
        %v310 = vld [vmem:[%s225 + $0x18] sm:$0xff]
        %v311 = vld [vmem:[%s225 + $0x20] sm:$0xff]
        %v312 = vld [vmem:[%s225 + $0x28] sm:$0xff]
        %v313 = vld [vmem:[%s225 + $0x30] sm:$0xff]
        %v314 = vld [vmem:[%s225 + $0x38] sm:$0xff]
        %v315 = vld [vmem:[%s225 + $0x40] sm:$0xff]
        %v316 = vld [vmem:[%s225 + $0x48] sm:$0xff]
        %v317 = vld [vmem:[%s225 + $0x50] sm:$0xff]
        %v318 = vld [vmem:[%s225 + $0x58] sm:$0xff]
        %v319 = vld [vmem:[%s225 + $0x60] sm:$0xff]
        %v320 = vld [vmem:[%s225 + $0x68] sm:$0xff]
        %v321 = vld [vmem:[%s225 + $0x70] sm:$0xff]
        %v322 = vld [vmem:[%s225 + $0x78] sm:$0xff]
        %v323 = vperm.slane %v300, 0
        %324 = vmatpush.msra.mxu0 %v283
        %325 = vmatpush.msra.mxu0 %v282
        %326 = vmatpush.msra.mxu0 %v281
        %327 = vmatpush.msra.mxu0 %v280
        %328 = vmatpush.msra.mxu0 %v279
        %329 = vmatpush.msra.mxu0 %v278
        %330 = vmatpush.msra.mxu0 %v277
        %331 = vmatpush.msra.mxu0 %v276
        %332 = vmatpush.msra.mxu0 %v275
        %333 = vmatpush.msra.mxu0 %v274
        %334 = vmatpush.msra.mxu0 %v273
        %335 = vmatpush.msra.mxu0 %v272
        %336 = vmatpush.msra.mxu0 %v271
        %337 = vmatpush.msra.mxu0 %v270
        %338 = vmatpush.msra.mxu0 %v269
        %339 = vmatpush.msra.mxu0 %v268
        %340 = vmatmul.f32.gmra.mxu0 %v307
        %v341 = vpop.f32.mrf.mxu0
        %v342 = vadd.f32 %v323, %v341
        %343 = vmatmul.f32.gmra.mxu0 %v308
        %v344 = vpop.f32.mrf.mxu0
        %v345 = vadd.f32 %v323, %v344
        %346 = vmatmul.f32.gmra.mxu0 %v309
        %v347 = vpop.f32.mrf.mxu0
        %v348 = vadd.f32 %v323, %v347
        %349 = vmatmul.f32.gmra.mxu0 %v310
        %v350 = vpop.f32.mrf.mxu0
        %v351 = vadd.f32 %v323, %v350
        %352 = vmatmul.f32.gmra.mxu0 %v311
        %v353 = vpop.f32.mrf.mxu0
        %v354 = vadd.f32 %v323, %v353
        %355 = vmatmul.f32.gmra.mxu0 %v312
        %v356 = vpop.f32.mrf.mxu0
        %v357 = vadd.f32 %v323, %v356
        %358 = vmatmul.f32.gmra.mxu0 %v313
        %v359 = vpop.f32.mrf.mxu0
        %v360 = vadd.f32 %v323, %v359
        %361 = vmatmul.f32.gmra.mxu0 %v314
        %v362 = vpop.f32.mrf.mxu0
        %v363 = vadd.f32 %v323, %v362
        %364 = vmatmul.f32.gmra.mxu0 %v315
        %v365 = vpop.f32.mrf.mxu0
        %v366 = vadd.f32 %v323, %v365
        %367 = vmatmul.f32.gmra.mxu0 %v316
        %v368 = vpop.f32.mrf.mxu0
        %v369 = vadd.f32 %v323, %v368
        %370 = vmatmul.f32.gmra.mxu0 %v317
        %v371 = vpop.f32.mrf.mxu0
        %v372 = vadd.f32 %v323, %v371
        %373 = vmatmul.f32.gmra.mxu0 %v318
        %v374 = vpop.f32.mrf.mxu0
        %v375 = vadd.f32 %v323, %v374
        %376 = vmatmul.f32.gmra.mxu0 %v319
        %v377 = vpop.f32.mrf.mxu0
        %v378 = vadd.f32 %v323, %v377
        %379 = vmatmul.f32.gmra.mxu0 %v320
        %v380 = vpop.f32.mrf.mxu0
        %v381 = vadd.f32 %v323, %v380
        %382 = vmatmul.f32.gmra.mxu0 %v321
        %v383 = vpop.f32.mrf.mxu0
        %v384 = vadd.f32 %v323, %v383
        %385 = vmatmul.f32.gmra.mxu0 %v322
        %v386 = vpop.f32.mrf.mxu0
        %v387 = vadd.f32 %v323, %v386
        %388 = vdwg.mxu0
        %v389 = vtanh.pop %v342
        %v390 = vtanh.pop %v345
        %v391 = vtanh.pop %v348
        %v392 = vtanh.pop %v351
        %v393 = vtanh.pop %v354
        %v394 = vtanh.pop %v357
        %v395 = vtanh.pop %v360
        %v396 = vtanh.pop %v363
        %v397 = vtanh.pop %v366
        %v398 = vtanh.pop %v369
        %v399 = vtanh.pop %v372
        %v400 = vtanh.pop %v375
        %v401 = vtanh.pop %v378
        %v402 = vtanh.pop %v381
        %v403 = vtanh.pop %v384
        %v404 = vtanh.pop %v387
        %v405 = vperm.slane %v301, 0
        %406 = vmatpush.msra.mxu0 %v299
        %407 = vmatpush.msra.mxu0 %v298
        %408 = vmatpush.msra.mxu0 %v297
        %409 = vmatpush.msra.mxu0 %v296
        %410 = vmatpush.msra.mxu0 %v295
        %411 = vmatpush.msra.mxu0 %v294
        %412 = vmatpush.msra.mxu0 %v293
        %413 = vmatpush.msra.mxu0 %v292
        %414 = vmatpush.msra.mxu0 %v291
        %415 = vmatpush.msra.mxu0 %v290
        %416 = vmatpush.msra.mxu0 %v289
        %417 = vmatpush.msra.mxu0 %v288
        %418 = vmatpush.msra.mxu0 %v287
        %419 = vmatpush.msra.mxu0 %v286
        %420 = vmatpush.msra.mxu0 %v285
        %421 = vmatpush.msra.mxu0 %v284
        %422 = vmatmul.f32.gmra.mxu0 %v389
        %v423 = vpop.f32.mrf.mxu0
        %v424 = vadd.f32 %v405, %v423
        %425 = vmatmul.f32.gmra.mxu0 %v390
        %v426 = vpop.f32.mrf.mxu0
        %v427 = vadd.f32 %v405, %v426
        %428 = vmatmul.f32.gmra.mxu0 %v391
        %v429 = vpop.f32.mrf.mxu0
        %v430 = vadd.f32 %v405, %v429
        %431 = vmatmul.f32.gmra.mxu0 %v392
        %v432 = vpop.f32.mrf.mxu0
        %v433 = vadd.f32 %v405, %v432
        %434 = vmatmul.f32.gmra.mxu0 %v393
        %v435 = vpop.f32.mrf.mxu0
        %v436 = vadd.f32 %v405, %v435
        %437 = vmatmul.f32.gmra.mxu0 %v394
        %v438 = vpop.f32.mrf.mxu0
        %v439 = vadd.f32 %v405, %v438
        %440 = vmatmul.f32.gmra.mxu0 %v395
        %v441 = vpop.f32.mrf.mxu0
        %v442 = vadd.f32 %v405, %v441
        %443 = vmatmul.f32.gmra.mxu0 %v396
        %v444 = vpop.f32.mrf.mxu0
        %v445 = vadd.f32 %v405, %v444
        %446 = vmatmul.f32.gmra.mxu0 %v397
        %v447 = vpop.f32.mrf.mxu0
        %v448 = vadd.f32 %v405, %v447
        %449 = vmatmul.f32.gmra.mxu0 %v398
        %v450 = vpop.f32.mrf.mxu0
        %v451 = vadd.f32 %v405, %v450
        %452 = vmatmul.f32.gmra.mxu0 %v399
        %v453 = vpop.f32.mrf.mxu0
        %v454 = vadd.f32 %v405, %v453
        %455 = vmatmul.f32.gmra.mxu0 %v400
        %v456 = vpop.f32.mrf.mxu0
        %v457 = vadd.f32 %v405, %v456
        %458 = vmatmul.f32.gmra.mxu0 %v401
        %v459 = vpop.f32.mrf.mxu0
        %v460 = vadd.f32 %v405, %v459
        %461 = vmatmul.f32.gmra.mxu0 %v402
        %v462 = vpop.f32.mrf.mxu0
        %v463 = vadd.f32 %v405, %v462
        %464 = vmatmul.f32.gmra.mxu0 %v403
        %v465 = vpop.f32.mrf.mxu0
        %v466 = vadd.f32 %v405, %v465
        %467 = vmatmul.f32.gmra.mxu0 %v404
        %v468 = vpop.f32.mrf.mxu0
        %v469 = vadd.f32 %v405, %v468
        %470 = vdwg.mxu0
        %v471 = vtanh.pop %v424
        %v472 = vtanh.pop %v427
        %v473 = vtanh.pop %v430
        %v474 = vtanh.pop %v433
        %v475 = vtanh.pop %v436
        %v476 = vtanh.pop %v439
        %v477 = vtanh.pop %v442
        %v478 = vtanh.pop %v445
        %v479 = vtanh.pop %v448
        %v480 = vtanh.pop %v451
        %v481 = vtanh.pop %v454
        %v482 = vtanh.pop %v457
        %v483 = vtanh.pop %v460
        %v484 = vtanh.pop %v463
        %v485 = vtanh.pop %v466
        %v486 = vtanh.pop %v469
        %v487 = vsel %vm306, 1, 0
        %vm488 = vcmp.eq.s32.totalorder %v487, 1
        %v489 = vsel %vm488, %v471, %v424
        %v490 = vsel %vm488, %v472, %v427
        %v491 = vsel %vm488, %v473, %v430
        %v492 = vsel %vm488, %v474, %v433
        %v493 = vsel %vm488, %v475, %v436
        %v494 = vsel %vm488, %v476, %v439
        %v495 = vsel %vm488, %v477, %v442
        %v496 = vsel %vm488, %v478, %v445
        %v497 = vsel %vm488, %v479, %v448
        %v498 = vsel %vm488, %v480, %v451
        %v499 = vsel %vm488, %v481, %v454
        %v500 = vsel %vm488, %v482, %v457
        %v501 = vsel %vm488, %v483, %v460
        %v502 = vsel %vm488, %v484, %v463
        %v503 = vsel %vm488, %v485, %v466
        %v504 = vsel %vm488, %v486, %v469
        %505 = vst [vmem:[%s265] sm:$0xff] %v489
        %506 = vst [vmem:[%s265 + $0x8] sm:$0xff] %v490
        %507 = vst [vmem:[%s265 + $0x10] sm:$0xff] %v491
        %508 = vst [vmem:[%s265 + $0x18] sm:$0xff] %v492
        %509 = vst [vmem:[%s265 + $0x20] sm:$0xff] %v493
        %510 = vst [vmem:[%s265 + $0x28] sm:$0xff] %v494
        %511 = vst [vmem:[%s265 + $0x30] sm:$0xff] %v495
        %512 = vst [vmem:[%s265 + $0x38] sm:$0xff] %v496
        %513 = vst [vmem:[%s265 + $0x40] sm:$0xff] %v497
        %514 = vst [vmem:[%s265 + $0x48] sm:$0xff] %v498
        %515 = vst [vmem:[%s265 + $0x50] sm:$0xff] %v499
        %516 = vst [vmem:[%s265 + $0x58] sm:$0xff] %v500
        %517 = vst [vmem:[%s265 + $0x60] sm:$0xff] %v501
        %518 = vst [vmem:[%s265 + $0x68] sm:$0xff] %v502
        %519 = vst [vmem:[%s265 + $0x70] sm:$0xff] %v503
        %520 = vst [vmem:[%s265 + $0x78] sm:$0xff] %v504
        %s521 = sand.u32 %s120, 1
        %s522 = scalar_lea.sflag [#allocation4], %s521
        %s523 = sand.u32 %s120, 1
        %s524 = smul.addr %s523, 128
        %s525 = scalar_lea.vmem [#allocation10], %s524
        // Predicated region
        $region53: #{tpu_custom_call.1} parent=35 // pred_check
          %p526 = pneg %p130
        $region54: #{tpu_custom_call.1} parent=35 // pred_check_branch
          %528 = sbr.rel (%p526) target = $region56
        $region55: #{tpu_custom_call.1} parent=35 // pred_region
          %s529 = smul.u32 16, %s23
          %531 = vsyncadd %s522, 0
          %s532 = smul.addr %s529, 8
          %s533 = scalar_lea.hbm %s4, %s532
          %s534 = sshll.u32 %s525, 4
          %s535 = int_to_ptr.vmem [resolvable:$true] %s534
          %s536 = sshll.u32 %s533, 4
          %s537 = int_to_ptr.hbm [resolvable:$true] %s536
          %542 = dma.vmem_to_hbm [thread:$0]  %s535, 2048, %s537, %s522, 128, 128, 8
        $region56: #{tpu_custom_call.1} parent=35 // pred_fallthru
          _
      $region36: #{tpu_custom_call.1} parent=5 // pred_fallthru
        _
      %p543 = scmp.le.s32.totalorder 2, %s18
      // Predicated region
      $region57: #{tpu_custom_call.1} parent=5 // pred_check
        %p544 = pneg %p543
      $region58: #{tpu_custom_call.1} parent=5 // pred_check_branch
        %546 = sbr.rel (%p544) target = $region60
      $region59: #{tpu_custom_call.1} parent=5 // pred_region
        %s547 = ssub.s32 %s18, 2
        // Predicated region
        $region61: #{tpu_custom_call.1} parent=59 // pred_check
          %p548 = pneg %p136
        $region62: #{tpu_custom_call.1} parent=59 // pred_check_branch
          %550 = sbr.rel (%p548) target = $region64
        $region63: #{tpu_custom_call.1} parent=59 // pred_region
          %s551 = sand.u32 %s121, 1
          %s552 = scalar_lea.sflag [#allocation4], %s551
          %s553 = sand.u32 %s121, 1
          %s554 = smul.addr %s553, 128
          %s555 = scalar_lea.vmem [#allocation10], %s554
          %557 = dma.done %s552, 2048
        $region64: #{tpu_custom_call.1} parent=59 // pred_fallthru
          _
      $region60: #{tpu_custom_call.1} parent=5 // pred_fallthru
        _
    $region6: #{tpu_custom_call.1} parent=1 // loop_footer
      %s22 = sadd.s32 1, %s18
    $region7: #{tpu_custom_call.1} parent=1 // loop_footer_branch
      %17 = sbr.rel target = $region3
    $region8: #{tpu_custom_call.1} parent=1 // loop_exit
      _
    %558 = vsyncpa [#allocation3], 1
    %s559 = scalar_lea.sflag [#allocation3], 1
    %560 = vsyncpa %s559, 1
    %561 = vsyncpa [#allocation6], 1
    %562 = vsyncpa [#allocation9], 1
    %563 = vsyncpa [#allocation4], 1
    %s564 = scalar_lea.sflag [#allocation4], 1
    %565 = vsyncpa %s564, 1

</llo_original>
